<compile_context>
chip_gen: v6e
topology: v6e:2x2x1
jax: 0.10.0
libtpu: 0.0.40
codegen_flags: <defaults>
</compile_context>

<pallas_src>
import functools
import math

import jax
import jax.numpy as jnp
from jax.experimental import pallas as pl
from jax.experimental.pallas import tpu as pltpu


def _round_up(x: int, m: int) -> int:
    return ((x + m - 1) // m) * m


def _vmem_budget_bytes() -> int:
    """~3/4 of physical VMEM: ~96 MiB on v5e/v6e (128 MiB), ~48 MiB on v7x (64 MiB)."""
    cap = 64 * 1024 * 1024  # conservative fallback = smallest physical VMEM (v7x)
    try:
        info = pltpu.get_tpu_info()
        for name in ("vmem_capacity_bytes", "vmem_size_bytes", "vmem_bytes"):
            v = getattr(info, name, None)
            if v:
                cap = int(v)
                break
    except Exception:
        pass
    return max(16 * 1024 * 1024, (cap * 3) // 4)


# --------------------------------------------------------------------------- #
# Call 1: streamed per-part mean pooling (mem-bound phase).
# --------------------------------------------------------------------------- #
def _pool_kernel(inv_cnt_ref, x_ref, out_ref):
    p = pl.program_id(0)          # part index   ("parallel")
    s = pl.program_id(1)          # spatial block ("arbitrary", accumulator axis)
    num_s = pl.num_programs(1)

    # bf16 bytes on the wire, f32 accumulation.
    blk_sum = jnp.sum(x_ref[...].astype(jnp.float32), axis=(0, 1))   # (n_pads, c_pad)

    @pl.when(s == 0)
    def _init():
        out_ref[...] = blk_sum

    @pl.when(s != 0)
    def _acc():
        out_ref[...] = out_ref[...] + blk_sum

    @pl.when(s == num_s - 1)
    def _scale():
        out_ref[...] = out_ref[...] * inv_cnt_ref[p]


# --------------------------------------------------------------------------- #
# Call 2: fc1 + per-part pairwise distances + min over parts (one shot).
# --------------------------------------------------------------------------- #
def _dist_kernel(pooled_ref, w1_ref, b1_ref, out_ref, *, n_pads: int, h_eff: int,
                 n_out: int):
    # One batched fc1 matmul for all parts (bf16 x bf16 -> f32 accumulation).
    feats = jnp.dot(pooled_ref[...].astype(jnp.bfloat16), w1_ref[...],
                    preferred_element_type=jnp.float32) + b1_ref[...]
    feats_bf = feats.astype(jnp.bfloat16)            # bf16 Gram fills the MXU
    feats_f = feats_bf.astype(jnp.float32)

    # Column (||a||^2) norms: one direct lane reduce -- no eye mask, no big temp.
    sq_col_all = jnp.sum(feats_f * feats_f, axis=1, keepdims=True)   # (h*n_pads, 1)

    row_ids = jax.lax.broadcasted_iota(jnp.int32, (n_pads, n_pads), 0)
    col_ids = jax.lax.broadcasted_iota(jnp.int32, (n_pads, n_pads), 1)
    eye = row_ids == col_ids                          # hoisted out of the part loop

    dmin2 = None
    for pp in range(h_eff):                           # h is small; static loop
        fp = feats_bf[pp * n_pads:(pp + 1) * n_pads, :]          # (n_pads, d_pad)
        # G = fp @ fp.T (contract last dims, no transpose), f32 accumulation.
        g = jax.lax.dot_general(fp, fp, (((1,), (1,)), ((), ())),
                                preferred_element_type=jnp.float32)
        # Row (||b||^2) norms from diag(G): one masked sublane reduce; avoids a
        # (n,1)->(1,n) relayout/transpose.
        sq_row = jnp.sum(jnp.where(eye, g, 0.0), axis=0, keepdims=True)  # (1, n_pads)
        sq_col = sq_col_all[pp * n_pads:(pp + 1) * n_pads, :]            # (n_pads, 1)
        d2 = jnp.maximum(sq_col + sq_row - 2.0 * g, 0.0)
        dmin2 = d2 if dmin2 is None else jnp.minimum(dmin2, d2)

    dmin = jnp.sqrt(dmin2)        # sqrt deferred past the min over parts (monotone)
    if n_pads == n_out:
        out_ref[...] = dmin
    else:
        out_ref[...] = jnp.zeros_like(out_ref)
        out_ref[0:n_pads, 0:n_pads] = dmin


def pnnm_tta_loss(backbone_feat, w1, b1, *, h: int, margin: float, k: int,
                  vmem_budget_bytes: int | None = None):
    """Forward pass of PNNMTTALoss.

    backbone_feat: (N, C, H, W) feature map (any float dtype; streamed as bf16)
    w1: (C, D) fc1 weight (transposed vs. torch.nn.Linear.weight layout)
    b1: (D,)   fc1 bias
    The streaming S-block is auto-sized from a per-generation VMEM budget.
    """
    N, C, H, W = backbone_feat.shape
    D = w1.shape[1]
    hp = math.ceil(H / h)
    h_eff = math.ceil(H / hp)          # torch.split may yield fewer than h parts
    s_true = hp * W

    # per-part true spatial element counts (last part may be smaller).
    counts = [(min((pi + 1) * hp, H) - pi * hp) * W for pi in range(h_eff)]
    inv_cnt = jnp.asarray([1.0 / c for c in counts], dtype=jnp.float32)

    # Padding: N only to the bf16 sublane multiple for the mem-bound stream;
    # channels / features lane-dense; only the final distance output is padded
    # to lane width 128.
    n_pads = _round_up(N, 16)
    c_pad = _round_up(C, 128)
    d_pad = _round_up(D, 128)
    n_out = _round_up(N, 128)

    # S-block from the per-generation VMEM budget.  Bytes per unit of s_blk:
    # double-buffered bf16 input tile (2*2B) + the f32 cast intermediate of the
    # in-kernel reduce (4B).  Prefer s_blk == s_true (one grid step per part).
    budget = vmem_budget_bytes if vmem_budget_bytes is not None else _vmem_budget_bytes()
    out_blk_bytes = 2 * n_pads * c_pad * 4
    per_s_bytes = n_pads * c_pad * (2 * 2 + 4)
    s_blk_max = max(1, (budget - out_blk_bytes) // per_s_bytes)
    num_s = math.ceil(s_true / min(s_true, s_blk_max))
    s_blk = math.ceil(s_true / num_s)              # divides s_pad; minimal padding
    s_pad = s_blk * num_s

    # (N, C, H, W) -> (h_eff, S, N, C); bf16 cast first so the pad/transpose
    # pre-pass materialises half the HBM bytes.
    x = backbone_feat.astype(jnp.bfloat16)
    x = jnp.pad(x, ((0, 0), (0, 0), (0, h_eff * hp - H), (0, 0)))
    x = x.reshape(N, C, h_eff, hp, W)
    x = jnp.transpose(x, (2, 3, 4, 0, 1)).reshape(h_eff, s_true, N, C)
    x = jnp.pad(x, ((0, 0), (0, s_pad - s_true), (0, n_pads - N), (0, c_pad - C)))

    # ---- call 1: streamed mean pooling (part axis parallel -> megacore) ------
    pooled = pl.pallas_call(
        _pool_kernel,
        out_shape=jax.ShapeDtypeStruct((h_eff * n_pads, c_pad), jnp.float32),
        grid_spec=pltpu.PrefetchScalarGridSpec(
            num_scalar_prefetch=0,
            grid=(h_eff, num_s),
            in_specs=[
                # per-part 1/count scalars live in SMEM
                pl.BlockSpec(memory_space=pltpu.MemorySpace.SMEM),
                # bf16 feature stream, S-blocked, minimal N padding
                pl.BlockSpec((1, s_blk, n_pads, c_pad), lambda p, s: (p, s, 0, 0)),
            ],
            out_specs=pl.BlockSpec((n_pads, c_pad), lambda p, s: (p, 0)),
        ),
        compiler_params=pltpu.CompilerParams(
            dimension_semantics=("parallel", "arbitrary"),
            vmem_limit_bytes=budget,
        ),
    )(inv_cnt, x)

    # ---- call 2: fc1 + pairwise distance + min over parts (tiny, one shot) ---
    w1_p = jnp.pad(w1, ((0, c_pad - C), (0, d_pad - D))).astype(jnp.bfloat16)
    b1_p = jnp.pad(b1, (0, d_pad - D)).reshape(1, d_pad).astype(jnp.float32)

    dist_kernel = functools.partial(_dist_kernel, n_pads=n_pads, h_eff=h_eff,
                                    n_out=n_out)
    dmin = pl.pallas_call(
        dist_kernel,
        out_shape=jax.ShapeDtypeStruct((n_out, n_out), jnp.float32),
        compiler_params=pltpu.CompilerParams(vmem_limit_bytes=budget),
    )(pooled, w1_p, b1_p)

    # ---- epilogue (tiny, plain JAX): top-k mining + margin loss --------------
    d = dmin[:N, :N]
    neg_topk = jax.lax.top_k(d.reshape(-1), 2 * k)[0]              # largest
    # mask the diagonal with a sentinel strictly above every off-diagonal value
    # (robust even if all distances are ~0, unlike adding max(d) alone).
    d_pos = d + jnp.eye(N, dtype=d.dtype) * (jnp.max(d) + 1.0)
    pos_topk = -jax.lax.top_k(-d_pos.reshape(-1), 2 * k)[0]        # smallest
    loss = jnp.sum(jax.nn.relu(margin + pos_topk - neg_topk)) / 2.0
    return loss


if __name__ == "__main__":
    key = jax.random.PRNGKey(0)
    kx, kw, kb = jax.random.split(key, 3)

    # small shapes consistent with the module: (N, C, H, W) feature map,
    # fc1: C -> D, h vertical parts, top-k margin mining.
    N, C, H, W = 8, 16, 8, 8
    D = 32
    h = 2
    margin = 0.3
    k = 3

    x = jax.random.normal(kx, (N, C, H, W), dtype=jnp.float32)
    w1 = jax.random.normal(kw, (C, D), dtype=jnp.float32) * 0.1
    b1 = jax.random.normal(kb, (D,), dtype=jnp.float32) * 0.1

    loss = pnnm_tta_loss(x, w1, b1, h=h, margin=margin, k=k)
    loss = jax.block_until_ready(loss)

    # loose sanity check against a pure-JAX reference (bf16 streaming => loose tol).
    def ref_loss(x, w1, b1):
        hp = math.ceil(H / h)
        parts = [x[:, :, i * hp:(i + 1) * hp, :].mean(axis=(2, 3))
                 for i in range(math.ceil(H / hp))]
        z = jnp.stack(parts, axis=0)                 # (h, N, C)
        z = z @ w1 + b1                              # (h, N, D)
        sq = jnp.sum(z * z, axis=-1)
        d2 = sq[:, :, None] + sq[:, None, :] - 2.0 * jnp.einsum('hnd,hmd->hnm', z, z)
        dist = jnp.sqrt(jnp.maximum(d2, 0.0))
        nn_d = jnp.min(dist, axis=0)
        neg = jax.lax.top_k(nn_d.reshape(-1), 2 * k)[0]
        nn_d2 = nn_d + jnp.eye(N, dtype=nn_d.dtype) * jnp.max(nn_d)
        pos = -jax.lax.top_k(-nn_d2.reshape(-1), 2 * k)[0]
        return jnp.sum(jax.nn.relu(margin + pos - neg)) / 2.0

    ref = jax.block_until_ready(ref_loss(x, w1, b1))
    assert bool(jnp.isfinite(loss)), "loss is not finite"
    assert float(jnp.abs(loss - ref)) < 0.1 * (1.0 + float(jnp.abs(ref))), (loss, ref)

    print("KERNEL_OK")
</pallas_src>

<mosaic_0001>
module attributes {stable_mosaic.version = 11 : i64} {
  func.func @_pool_kernel(%arg0: i32, %arg1: i32, %arg2: memref<2xf32, #tpu.memory_space<smem>>, %arg3: memref<1x32x16x128xbf16, #tpu.memory_space<vmem>>, %arg4: memref<16x128xf32, #tpu.memory_space<vmem>>) attributes {dimension_semantics = [#tpu.dimension_semantics<parallel>, #tpu.dimension_semantics<arbitrary>], iteration_bounds = array<i64: 2, 1>, scalar_prefetch = 0 : i64, scratch_operands = 0 : i64, tpu.core_type = #tpu.core_type<tc>, window_params = [{transform_indices = @transform_0, window_bounds = array<i64: 2>}, {transform_indices = @transform_1, window_bounds = array<i64: 1, 32, 16, 128>}, {transform_indices = @transform_2, window_bounds = array<i64: 16, 128>}]} {
    %c0 = arith.constant 0 : index
    %c0_0 = arith.constant 0 : index
    %c0_1 = arith.constant 0 : index
    %c0_2 = arith.constant 0 : index
    %0 = vector.load %arg3[%c0, %c0_0, %c0_1, %c0_2] : memref<1x32x16x128xbf16, #tpu.memory_space<vmem>>, vector<1x32x16x128xbf16>
    %1 = arith.extf %0 : vector<1x32x16x128xbf16> to vector<1x32x16x128xf32>
    %cst = arith.constant dense<0.000000e+00> : vector<16x128xf32>
    %2 = vector.multi_reduction <add>, %1, %cst [0, 1] : vector<1x32x16x128xf32> to vector<16x128xf32>
    %c0_i32 = arith.constant 0 : i32
    %3 = arith.cmpi eq, %arg1, %c0_i32 : i32
    %4 = arith.extui %3 : i1 to i32
    %c0_i32_3 = arith.constant 0 : i32
    %5 = arith.cmpi ne, %4, %c0_i32_3 : i32
    scf.if %5 {
      %c0_8 = arith.constant 0 : index
      %c0_9 = arith.constant 0 : index
      %12 = vector.load %arg4[%c0_8, %c0_9] : memref<16x128xf32, #tpu.memory_space<vmem>>, vector<16x128xf32>
      tpu.vector_store %arg4[%c0_8, %c0_9], %2 {strides = array<i32>} : memref<16x128xf32, #tpu.memory_space<vmem>>, vector<16x128xf32>,
    } else {
    }
    %c0_i32_4 = arith.constant 0 : i32
    %6 = arith.cmpi ne, %arg1, %c0_i32_4 : i32
    %7 = arith.extui %6 : i1 to i32
    %c0_i32_5 = arith.constant 0 : i32
    %8 = arith.cmpi ne, %7, %c0_i32_5 : i32
    scf.if %8 {
      %c0_8 = arith.constant 0 : index
      %c0_9 = arith.constant 0 : index
      %12 = vector.load %arg4[%c0_8, %c0_9] : memref<16x128xf32, #tpu.memory_space<vmem>>, vector<16x128xf32>
      %13 = arith.addf %12, %2 : vector<16x128xf32>
      %c0_10 = arith.constant 0 : index
      %c0_11 = arith.constant 0 : index
      %14 = vector.load %arg4[%c0_10, %c0_11] : memref<16x128xf32, #tpu.memory_space<vmem>>, vector<16x128xf32>
      tpu.vector_store %arg4[%c0_10, %c0_11], %13 {strides = array<i32>} : memref<16x128xf32, #tpu.memory_space<vmem>>, vector<16x128xf32>,
    } else {
    }
    %c0_i32_6 = arith.constant 0 : i32
    %9 = arith.cmpi eq, %arg1, %c0_i32_6 : i32
    %10 = arith.extui %9 : i1 to i32
    %c0_i32_7 = arith.constant 0 : i32
    %11 = arith.cmpi ne, %10, %c0_i32_7 : i32
    scf.if %11 {
      %c0_8 = arith.constant 0 : index
      %c0_9 = arith.constant 0 : index
      %12 = vector.load %arg4[%c0_8, %c0_9] : memref<16x128xf32, #tpu.memory_space<vmem>>, vector<16x128xf32>
      %13 = arith.index_cast %arg0 : i32 to index
      %14 = memref.load %arg2[%13] : memref<2xf32, #tpu.memory_space<smem>>
      %15 = vector.broadcast %14 : f32 to vector<16x128xf32>
      %16 = arith.mulf %12, %15 : vector<16x128xf32>
      %c0_10 = arith.constant 0 : index
      %c0_11 = arith.constant 0 : index
      %17 = vector.load %arg4[%c0_10, %c0_11] : memref<16x128xf32, #tpu.memory_space<vmem>>, vector<16x128xf32>
      tpu.vector_store %arg4[%c0_10, %c0_11], %16 {strides = array<i32>} : memref<16x128xf32, #tpu.memory_space<vmem>>, vector<16x128xf32>,
    } else {
    }
    return
  }
  func.func @transform_0(%arg0: i32, %arg1: i32) -> i32 {
    %c0_i32 = arith.constant 0 : i32
    %c0_i32_0 = arith.constant 0 : i32
    return %c0_i32 : i32
  }
  func.func @transform_1(%arg0: i32, %arg1: i32) -> (i32, i32, i32, i32) {
    %c0_i32 = arith.constant 0 : i32
    %c0_i32_0 = arith.constant 0 : i32
    %c0_i32_1 = arith.constant 0 : i32
    return %arg0, %arg1, %c0_i32, %c0_i32_0 : i32, i32, i32, i32
  }
  func.func @transform_2(%arg0: i32, %arg1: i32) -> (i32, i32) {
    %c0_i32 = arith.constant 0 : i32
    %c0_i32_0 = arith.constant 0 : i32
    return %arg0, %c0_i32 : i32, i32
  }
}

</mosaic_0001>

<llo_original>
// kernel: tpu_custom_call.1
$region0: #{tpu_custom_call.1}
  #allocation0 [shape = 'u32[]', space=smem, size = 0x4, offset = 0x4, fixed_abs, tag = 'smem constant byte address 0x4 - core index']
  #allocation1 [shape = 'u32[144,128]{1,0:T(1,128)}', space=vmem, size = 0x12000, scoped, tag = 'internal scratch']
  %s0 = inlined_call_operand.hbm [shape: f32[2], index: 0, kind: input, shape index: {}]
  %s1 = inlined_call_operand.hbm [shape: bf16[2,32,16,128], index: 1, kind: input, shape index: {}]
  %s2 = inlined_call_operand.hbm [shape: f32[32,128], index: 2, kind: output, shape index: {}]
  %s3 = sld [smem:[#allocation0]]
  $region61: #{tpu_custom_call.1} parent=0
    _
  %s5 = ssub.s32 1, %s3
  %s6 = scalar_select 0, %s5, %s3
  $region1: #{tpu_custom_call.1} parent=0
    #allocation2 [shape = 'u8[512]{0}', space=smem, size = 0x200, scoped, tag = 'input window, operand 0, single buffered']
    #allocation3 [shape = 's32[2]{0}', space=sflag, size = 0x8, scoped, tag = 'scoped memory for tpu_custom_call.1']
    #allocation4 [shape = 's32[2]{0}', space=sflag, size = 0x8, scoped, tag = 'scoped memory for tpu_custom_call.1']
    #allocation5 [shape = 's32[2]{0}', space=sflag, size = 0x8, scoped, tag = 'scoped memory for tpu_custom_call.1']
    #allocation6 [shape = 'u8[262144]{0}', space=vmem, size = 0x40000, scoped, tag = 'input window, operand 1']
    #allocation7 [shape = 'u8[16384]{0}', space=vmem, size = 0x4000, scoped, tag = 'output window, operand 0']
    %7 = vsyncpa [#allocation5], 0
    %8 = vsyncpa [#allocation3], 0
    %s9 = scalar_lea.sflag [#allocation3], 1
    %10 = vsyncpa %s9, 0
    %11 = vsyncpa [#allocation4], 0
    %s12 = scalar_lea.sflag [#allocation4], 1
    %13 = vsyncpa %s12, 0
    loop: start=0, step=1, limit=4
    $region2: #{tpu_custom_call.1} parent=1 // loop_pre_header
      _
    $region3: #{tpu_custom_call.1} parent=1 // loop_header
      %s15 = sphi 0, %s19
      %p16 = scmp.ge.s32.totalorder %s15, 4
      %s22 = sphi 0, %s34
      %s23 = sphi 0, %s30
      %s24 = sphi 0, %s22
      %s25 = sphi 0, %s23
      %s26 = sphi 0, %s24
      %s27 = sphi 0, %s25
      %s35 = sphi 0, %s35
      %s37 = sphi 0, %s35
      %s38 = sphi 0, %s37
      %s52 = sphi 0, %s38
      %s60 = sphi 0, %s62
      %s63 = sphi 0, %s60
      %s64 = sphi 0, %s63
      %s80 = sphi 0, %s64
      %s86 = sphi 0, %s88
      %s89 = sphi 0, %s86
      %s90 = sphi 0, %s89
      %s106 = sphi 0, %s90
    $region4: #{tpu_custom_call.1} parent=1 // loop_header_branch
      %18 = sbr.rel (%p16) target = $region8
    $region5: #{tpu_custom_call.1} parent=1 // loop_body
      %s20 = ssub.s32 %s15, 1
      %s21 = ssub.s32 %s15, 2
      %s28 = sadd.s32 1, %s23
      %p29 = scmp.ge.s32.totalorder %s28, 1
      %s30 = scalar_select %p29, 0, %s28
      %s31 = sadd.s32 1, %s22
      %s32 = scalar_select %p29, %s31, %s22
      %p33 = scmp.ge.s32.totalorder %s32, 2
      %s34 = scalar_select %p33, 0, %s32
      %s36 = sadd.s32 %s35, 1
      %p39 = scmp.eq.s32.totalorder %s15, 1
      %p40 = scmp.ne.s32.totalorder %s35, %s37
      %p41 = scmp.eq.s32.totalorder %s15, 0
      %p42 = por %p40, %p41
      %p43 = scmp.ne.s32.totalorder %s35, %s37
      %p44 = scmp.eq.s32.totalorder %s20, 1
      %p45 = por %p43, %p44
      %p46 = scmp.ne.s32.totalorder %s37, %s38
      %p47 = scmp.eq.s32.totalorder %s20, 0
      %p48 = por %p46, %p47
      %p49 = scmp.ne.s32.totalorder %s37, %s38
      %p50 = scmp.eq.s32.totalorder %s21, 1
      %p51 = por %p49, %p50
      %p53 = scmp.ne.s32.totalorder %s38, %s52
      %p54 = scmp.eq.s32.totalorder %s21, 0
      %p55 = por %p53, %p54
      %s56 = ssub.s32 %s22, %s34
      %s57 = ssub.s32 %s23, %s30
      %s58 = sor.u32 %s56, %s57
      %p59 = scmp.eq.s32.totalorder %s58, 0
      %s61 = sadd.s32 %s60, 1
      %s62 = scalar_select %p59, %s60, %s61
      %p65 = pneg %p59
      %p66 = scmp.eq.s32.totalorder %s15, 1
      %p67 = por %p65, %p66
      %p68 = scmp.ne.s32.totalorder %s60, %s63
      %p69 = scmp.eq.s32.totalorder %s15, 0
      %p70 = por %p68, %p69
      %p71 = scmp.ne.s32.totalorder %s60, %s63
      %p72 = scmp.eq.s32.totalorder %s20, 1
      %p73 = por %p71, %p72
      %p74 = scmp.ne.s32.totalorder %s63, %s64
      %p75 = scmp.eq.s32.totalorder %s20, 0
      %p76 = por %p74, %p75
      %p77 = scmp.ne.s32.totalorder %s63, %s64
      %p78 = scmp.eq.s32.totalorder %s21, 1
      %p79 = por %p77, %p78
      %p81 = scmp.ne.s32.totalorder %s64, %s80
      %p82 = scmp.eq.s32.totalorder %s21, 0
      %p83 = por %p81, %p82
      %s84 = ssub.s32 %s22, %s34
      %p85 = scmp.eq.s32.totalorder %s84, 0
      %s87 = sadd.s32 %s86, 1
      %s88 = scalar_select %p85, %s86, %s87
      %p91 = pneg %p85
      %p92 = scmp.eq.s32.totalorder %s15, 1
      %p93 = por %p91, %p92
      %p94 = scmp.ne.s32.totalorder %s86, %s89
      %p95 = scmp.eq.s32.totalorder %s15, 0
      %p96 = por %p94, %p95
      %p97 = scmp.ne.s32.totalorder %s86, %s89
      %p98 = scmp.eq.s32.totalorder %s20, 1
      %p99 = por %p97, %p98
      %p100 = scmp.ne.s32.totalorder %s89, %s90
      %p101 = scmp.eq.s32.totalorder %s20, 0
      %p102 = por %p100, %p101
      %p103 = scmp.ne.s32.totalorder %s89, %s90
      %p104 = scmp.eq.s32.totalorder %s21, 1
      %p105 = por %p103, %p104
      %p107 = scmp.ne.s32.totalorder %s90, %s106
      %p108 = scmp.eq.s32.totalorder %s21, 0
      %p109 = por %p107, %p108
      %p110 = scmp.le.s32.totalorder 1, %s15
      %p111 = scmp.lt.s32.totalorder %s15, 3
      %p112 = pnand %p110, %p111
      %p113 = pneg %p112
      // Predicated region
      $region9: #{tpu_custom_call.1} parent=5 // pred_check
        _
      $region10: #{tpu_custom_call.1} parent=5 // pred_check_branch
        %115 = sbr.rel (%p112) target = $region12
      $region11: #{tpu_custom_call.1} parent=5 // pred_region
        %s116 = ssub.s32 %s15, 1
        // Predicated region
        $region13: #{tpu_custom_call.1} parent=11 // pred_check
          %p117 = pneg %p48
        $region14: #{tpu_custom_call.1} parent=11 // pred_check_branch
          %119 = sbr.rel (%p117) target = $region16
        $region15: #{tpu_custom_call.1} parent=11 // pred_region
          %s121 = ssub.s32 16, 16
          %122 = vsyncadd [#allocation5], %s121
          %125 = dma.hbm_to_smem %s0, 16, [#allocation2], [#allocation5]
        $region16: #{tpu_custom_call.1} parent=11 // pred_fallthru
          _
      $region12: #{tpu_custom_call.1} parent=5 // pred_fallthru
        _
      %p126 = scmp.lt.s32.totalorder %s15, 2
      // Predicated region
      $region17: #{tpu_custom_call.1} parent=5 // pred_check
        %p127 = pneg %p126
      $region18: #{tpu_custom_call.1} parent=5 // pred_check_branch
        %129 = sbr.rel (%p127) target = $region20
      $region19: #{tpu_custom_call.1} parent=5 // pred_region
        // Predicated region
        $region21: #{tpu_custom_call.1} parent=19 // pred_check
          %p130 = pneg %p70
        $region22: #{tpu_custom_call.1} parent=19 // pred_check_branch
          %132 = sbr.rel (%p130) target = $region24
        $region23: #{tpu_custom_call.1} parent=19 // pred_region
          %s133 = sand.u32 %s60, 1
          %s134 = scalar_lea.sflag [#allocation3], %s133
          %s135 = sand.u32 %s60, 1
          %s136 = smul.addr %s135, 256
          %s137 = scalar_lea.vmem [#allocation6], %s136
          %s138 = smul.u32 32, %s23
          %s140 = ssub.s32 4096, 4096
          %141 = vsyncadd %s134, %s140
          %s142 = smul.addr %s138, 2
          %s143 = smul.addr %s22, 64
          %s144 = sadd.s32 %s142, %s143
          %s145 = smul.addr %s144, 64
          %s146 = scalar_lea.hbm %s1, %s145
          %s147 = sshll.u32 %s137, 4
          %s148 = int_to_ptr.vmem [resolvable:$true] %s147
          %153 = dma.hbm_to_vmem [thread:$0]  %s146, 4096, %s148, %s134, 64, 64, 4
        $region24: #{tpu_custom_call.1} parent=19 // pred_fallthru
          _
      $region20: #{tpu_custom_call.1} parent=5 // pred_fallthru
        _
      %p154 = scmp.le.s32.totalorder 1, %s15
      %p155 = scmp.lt.s32.totalorder %s15, 3
      %p156 = pnand %p154, %p155
      %p157 = pneg %p156
      // Predicated region
      $region25: #{tpu_custom_call.1} parent=5 // pred_check
        _
      $region26: #{tpu_custom_call.1} parent=5 // pred_check_branch
        %159 = sbr.rel (%p156) target = $region28
      $region27: #{tpu_custom_call.1} parent=5 // pred_region
        %s160 = ssub.s32 %s15, 1
        // Predicated region
        $region29: #{tpu_custom_call.1} parent=27 // pred_check
          %p161 = pneg %p48
        $region30: #{tpu_custom_call.1} parent=27 // pred_check_branch
          %163 = sbr.rel (%p161) target = $region32
        $region31: #{tpu_custom_call.1} parent=27 // pred_region
          %164 = dma.done [#allocation5], 16
        $region32: #{tpu_custom_call.1} parent=27 // pred_fallthru
          _
        %s165 = sand.u32 %s63, 1
        %s166 = scalar_lea.sflag [#allocation3], %s165
        %s167 = sand.u32 %s63, 1
        %s168 = smul.addr %s167, 256
        %s169 = scalar_lea.vmem [#allocation6], %s168
        // Predicated region
        $region33: #{tpu_custom_call.1} parent=27 // pred_check
          %p170 = pneg %p76
        $region34: #{tpu_custom_call.1} parent=27 // pred_check_branch
          %172 = sbr.rel (%p170) target = $region36
        $region35: #{tpu_custom_call.1} parent=27 // pred_region
          %173 = dma.done %s166, 4096
        $region36: #{tpu_custom_call.1} parent=27 // pred_fallthru
          _
        %174 = sfence
        %p175 = pneg %p48
        %p176 = pneg %p45
        %s177 = sand.u32 %s63, 1
        %s178 = scalar_lea.sflag [#allocation3], %s177
        %s179 = sand.u32 %s63, 1
        %s180 = smul.addr %s179, 256
        %s181 = scalar_lea.vmem [#allocation6], %s180
        %p182 = pneg %p76
        %p183 = pneg %p73
        %p184 = pneg %p102
        %p185 = pneg %p99
        %s186 = sand.u32 %s89, 1
        %s187 = scalar_lea.sflag [#allocation4], %s186
        %s188 = sand.u32 %s89, 1
        %s189 = smul.addr %s188, 16
        %s190 = scalar_lea.vmem [#allocation7], %s189
        %s191 = smul.u32 32, %s25
        %s192 = smul.u32 2, %s24
        %v193 = vld [vmem:[%s169] sm:$0xf]
        %v194 = vld [vmem:[%s169 + $0x4] sm:$0xf]
        %v195 = vld [vmem:[%s169 + $0x8] sm:$0xf]
        %v196 = vld [vmem:[%s169 + $0xc] sm:$0xf]
        %v197 = vld [vmem:[%s169 + $0x10] sm:$0xf]
        %v198 = vld [vmem:[%s169 + $0x14] sm:$0xf]
        %v199 = vld [vmem:[%s169 + $0x18] sm:$0xf]
        %v200 = vld [vmem:[%s169 + $0x1c] sm:$0xf]
        %v201 = vld [vmem:[%s169 + $0x20] sm:$0xf]
        %v202 = vld [vmem:[%s169 + $0x24] sm:$0xf]
        %v203 = vld [vmem:[%s169 + $0x28] sm:$0xf]
        %v204 = vld [vmem:[%s169 + $0x2c] sm:$0xf]
        %v205 = vld [vmem:[%s169 + $0x30] sm:$0xf]
        %v206 = vld [vmem:[%s169 + $0x34] sm:$0xf]
        %v207 = vld [vmem:[%s169 + $0x38] sm:$0xf]
        %v208 = vld [vmem:[%s169 + $0x3c] sm:$0xf]
        %v209 = vld [vmem:[%s169 + $0x40] sm:$0xf]
        %v210 = vld [vmem:[%s169 + $0x44] sm:$0xf]
        %v211 = vld [vmem:[%s169 + $0x48] sm:$0xf]
        %v212 = vld [vmem:[%s169 + $0x4c] sm:$0xf]
        %v213 = vld [vmem:[%s169 + $0x50] sm:$0xf]
        %v214 = vld [vmem:[%s169 + $0x54] sm:$0xf]
        %v215 = vld [vmem:[%s169 + $0x58] sm:$0xf]
        %v216 = vld [vmem:[%s169 + $0x5c] sm:$0xf]
        %v217 = vld [vmem:[%s169 + $0x60] sm:$0xf]
        %v218 = vld [vmem:[%s169 + $0x64] sm:$0xf]
        %v219 = vld [vmem:[%s169 + $0x68] sm:$0xf]
        %v220 = vld [vmem:[%s169 + $0x6c] sm:$0xf]
        %v221 = vld [vmem:[%s169 + $0x70] sm:$0xf]
        %v222 = vld [vmem:[%s169 + $0x74] sm:$0xf]
        %v223 = vld [vmem:[%s169 + $0x78] sm:$0xf]
        %v224 = vld [vmem:[%s169 + $0x7c] sm:$0xf]
        %v225 = vld [vmem:[%s169 + $0x80] sm:$0xf]
        %v226 = vld [vmem:[%s169 + $0x84] sm:$0xf]
        %v227 = vld [vmem:[%s169 + $0x88] sm:$0xf]
        %v228 = vld [vmem:[%s169 + $0x8c] sm:$0xf]
        %v229 = vld [vmem:[%s169 + $0x90] sm:$0xf]
        %v230 = vld [vmem:[%s169 + $0x94] sm:$0xf]
        %v231 = vld [vmem:[%s169 + $0x98] sm:$0xf]
        %v232 = vld [vmem:[%s169 + $0x9c] sm:$0xf]
        %v233 = vld [vmem:[%s169 + $0xa0] sm:$0xf]
        %v234 = vld [vmem:[%s169 + $0xa4] sm:$0xf]
        %v235 = vld [vmem:[%s169 + $0xa8] sm:$0xf]
        %v236 = vld [vmem:[%s169 + $0xac] sm:$0xf]
        %v237 = vld [vmem:[%s169 + $0xb0] sm:$0xf]
        %v238 = vld [vmem:[%s169 + $0xb4] sm:$0xf]
        %v239 = vld [vmem:[%s169 + $0xb8] sm:$0xf]
        %v240 = vld [vmem:[%s169 + $0xbc] sm:$0xf]
        %v241 = vld [vmem:[%s169 + $0xc0] sm:$0xf]
        %v242 = vld [vmem:[%s169 + $0xc4] sm:$0xf]
        %v243 = vld [vmem:[%s169 + $0xc8] sm:$0xf]
        %v244 = vld [vmem:[%s169 + $0xcc] sm:$0xf]
        %v245 = vld [vmem:[%s169 + $0xd0] sm:$0xf]
        %v246 = vld [vmem:[%s169 + $0xd4] sm:$0xf]
        %v247 = vld [vmem:[%s169 + $0xd8] sm:$0xf]
        %v248 = vld [vmem:[%s169 + $0xdc] sm:$0xf]
        %v249 = vld [vmem:[%s169 + $0xe0] sm:$0xf]
        %v250 = vld [vmem:[%s169 + $0xe4] sm:$0xf]
        %v251 = vld [vmem:[%s169 + $0xe8] sm:$0xf]
        %v252 = vld [vmem:[%s169 + $0xec] sm:$0xf]
        %v253 = vld [vmem:[%s169 + $0xf0] sm:$0xf]
        %v254 = vld [vmem:[%s169 + $0xf4] sm:$0xf]
        %v255 = vld [vmem:[%s169 + $0xf8] sm:$0xf]
        %v256 = vld [vmem:[%s169 + $0xfc] sm:$0xf]
        %v257 = vunpack.c.l.bf16 %v193
        %v258 = vunpack.c.l.bf16 %v194
        %v259 = vunpack.c.l.bf16 %v195
        %v260 = vunpack.c.l.bf16 %v196
        %v261 = vunpack.c.l.bf16 %v197
        %v262 = vunpack.c.l.bf16 %v198
        %v263 = vunpack.c.l.bf16 %v199
        %v264 = vunpack.c.l.bf16 %v200
        %v265 = vunpack.c.l.bf16 %v201
        %v266 = vunpack.c.l.bf16 %v202
        %v267 = vunpack.c.l.bf16 %v203
        %v268 = vunpack.c.l.bf16 %v204
        %v269 = vunpack.c.l.bf16 %v205
        %v270 = vunpack.c.l.bf16 %v206
        %v271 = vunpack.c.l.bf16 %v207
        %v272 = vunpack.c.l.bf16 %v208
        %v273 = vunpack.c.l.bf16 %v209
        %v274 = vunpack.c.l.bf16 %v210
        %v275 = vunpack.c.l.bf16 %v211
        %v276 = vunpack.c.l.bf16 %v212
        %v277 = vunpack.c.l.bf16 %v213
        %v278 = vunpack.c.l.bf16 %v214
        %v279 = vunpack.c.l.bf16 %v215
        %v280 = vunpack.c.l.bf16 %v216
        %v281 = vunpack.c.l.bf16 %v217
        %v282 = vunpack.c.l.bf16 %v218
        %v283 = vunpack.c.l.bf16 %v219
        %v284 = vunpack.c.l.bf16 %v220
        %v285 = vunpack.c.l.bf16 %v221
        %v286 = vunpack.c.l.bf16 %v222
        %v287 = vunpack.c.l.bf16 %v223
        %v288 = vunpack.c.l.bf16 %v224
        %v289 = vunpack.c.l.bf16 %v225
        %v290 = vunpack.c.l.bf16 %v226
        %v291 = vunpack.c.l.bf16 %v227
        %v292 = vunpack.c.l.bf16 %v228
        %v293 = vunpack.c.l.bf16 %v229
        %v294 = vunpack.c.l.bf16 %v230
        %v295 = vunpack.c.l.bf16 %v231
        %v296 = vunpack.c.l.bf16 %v232
        %v297 = vunpack.c.l.bf16 %v233
        %v298 = vunpack.c.l.bf16 %v234
        %v299 = vunpack.c.l.bf16 %v235
        %v300 = vunpack.c.l.bf16 %v236
        %v301 = vunpack.c.l.bf16 %v237
        %v302 = vunpack.c.l.bf16 %v238
        %v303 = vunpack.c.l.bf16 %v239
        %v304 = vunpack.c.l.bf16 %v240
        %v305 = vunpack.c.l.bf16 %v241
        %v306 = vunpack.c.l.bf16 %v242
        %v307 = vunpack.c.l.bf16 %v243
        %v308 = vunpack.c.l.bf16 %v244
        %v309 = vunpack.c.l.bf16 %v245
        %v310 = vunpack.c.l.bf16 %v246
        %v311 = vunpack.c.l.bf16 %v247
        %v312 = vunpack.c.l.bf16 %v248
        %v313 = vunpack.c.l.bf16 %v249
        %v314 = vunpack.c.l.bf16 %v250
        %v315 = vunpack.c.l.bf16 %v251
        %v316 = vunpack.c.l.bf16 %v252
        %v317 = vunpack.c.l.bf16 %v253
        %v318 = vunpack.c.l.bf16 %v254
        %v319 = vunpack.c.l.bf16 %v255
        %v320 = vunpack.c.l.bf16 %v256
        %v321 = vadd.f32 %v257, %v259
        %v322 = vadd.f32 %v321, %v261
        %v323 = vadd.f32 %v322, %v263
        %v324 = vadd.f32 %v323, %v265
        %v325 = vadd.f32 %v324, %v267
        %v326 = vadd.f32 %v325, %v269
        %v327 = vadd.f32 %v326, %v271
        %v328 = vadd.f32 %v327, %v273
        %v329 = vadd.f32 %v328, %v275
        %v330 = vadd.f32 %v329, %v277
        %v331 = vadd.f32 %v330, %v279
        %v332 = vadd.f32 %v331, %v281
        %v333 = vadd.f32 %v332, %v283
        %v334 = vadd.f32 %v333, %v285
        %v335 = vadd.f32 %v334, %v287
        %v336 = vadd.f32 %v335, %v289
        %v337 = vadd.f32 %v336, %v291
        %v338 = vadd.f32 %v337, %v293
        %v339 = vadd.f32 %v338, %v295
        %v340 = vadd.f32 %v339, %v297
        %v341 = vadd.f32 %v340, %v299
        %v342 = vadd.f32 %v341, %v301
        %v343 = vadd.f32 %v342, %v303
        %v344 = vadd.f32 %v343, %v305
        %v345 = vadd.f32 %v344, %v307
        %v346 = vadd.f32 %v345, %v309
        %v347 = vadd.f32 %v346, %v311
        %v348 = vadd.f32 %v347, %v313
        %v349 = vadd.f32 %v348, %v315
        %v350 = vadd.f32 %v349, %v317
        %v351 = vadd.f32 %v350, %v319
        %v352 = vadd.f32 %v258, %v260
        %v353 = vadd.f32 %v352, %v262
        %v354 = vadd.f32 %v353, %v264
        %v355 = vadd.f32 %v354, %v266
        %v356 = vadd.f32 %v355, %v268
        %v357 = vadd.f32 %v356, %v270
        %v358 = vadd.f32 %v357, %v272
        %v359 = vadd.f32 %v358, %v274
        %v360 = vadd.f32 %v359, %v276
        %v361 = vadd.f32 %v360, %v278
        %v362 = vadd.f32 %v361, %v280
        %v363 = vadd.f32 %v362, %v282
        %v364 = vadd.f32 %v363, %v284
        %v365 = vadd.f32 %v364, %v286
        %v366 = vadd.f32 %v365, %v288
        %v367 = vadd.f32 %v366, %v290
        %v368 = vadd.f32 %v367, %v292
        %v369 = vadd.f32 %v368, %v294
        %v370 = vadd.f32 %v369, %v296
        %v371 = vadd.f32 %v370, %v298
        %v372 = vadd.f32 %v371, %v300
        %v373 = vadd.f32 %v372, %v302
        %v374 = vadd.f32 %v373, %v304
        %v375 = vadd.f32 %v374, %v306
        %v376 = vadd.f32 %v375, %v308
        %v377 = vadd.f32 %v376, %v310
        %v378 = vadd.f32 %v377, %v312
        %v379 = vadd.f32 %v378, %v314
        %v380 = vadd.f32 %v379, %v316
        %v381 = vadd.f32 %v380, %v318
        %v382 = vadd.f32 %v381, %v320
        %p383 = scmp.eq.s32.totalorder %s25, 0
        // Predicated region
        $region37: #{tpu_custom_call.1} parent=27 // pred_check
          %p384 = pneg %p383
        $region38: #{tpu_custom_call.1} parent=27 // pred_check_branch
          %386 = sbr.rel (%p384) target = $region40
        $region39: #{tpu_custom_call.1} parent=27 // pred_region
          %387 = vst [vmem:[%s190] sm:$0xff] %v351
          %388 = vst [vmem:[%s190 + $0x8] sm:$0xff] %v382
        $region40: #{tpu_custom_call.1} parent=27 // pred_fallthru
          _
        %p389 = scmp.ne.s32.totalorder %s25, 0
        // Predicated region
        $region41: #{tpu_custom_call.1} parent=27 // pred_check
          %p390 = pneg %p389
        $region42: #{tpu_custom_call.1} parent=27 // pred_check_branch
          %392 = sbr.rel (%p390) target = $region44
        $region43: #{tpu_custom_call.1} parent=27 // pred_region
          %v393 = vld [vmem:[%s190] sm:$0xff]
          %v394 = vld [vmem:[%s190 + $0x8] sm:$0xff]
          %v395 = vadd.f32 %v393, %v351
          %v396 = vadd.f32 %v394, %v382
          %397 = vst [vmem:[%s190] sm:$0xff] %v395
          %398 = vst [vmem:[%s190 + $0x8] sm:$0xff] %v396
        $region44: #{tpu_custom_call.1} parent=27 // pred_fallthru
          _
        // Predicated region
        $region45: #{tpu_custom_call.1} parent=27 // pred_check
          %p399 = pneg %p383
        $region46: #{tpu_custom_call.1} parent=27 // pred_check_branch
          %401 = sbr.rel (%p399) target = $region48
        $region47: #{tpu_custom_call.1} parent=27 // pred_region
          %v402 = vld [vmem:[%s190] sm:$0xff]
          %v403 = vld [vmem:[%s190 + $0x8] sm:$0xff]
          %s404 = sld [smem:[#allocation2 + %s24]]
          %v405 = vstv %s404
          %v406 = vmul.f32 %v402, %v405
          %v407 = vmul.f32 %v403, %v405
          %408 = vst [vmem:[%s190] sm:$0xff] %v406
          %409 = vst [vmem:[%s190 + $0x8] sm:$0xff] %v407
        $region48: #{tpu_custom_call.1} parent=27 // pred_fallthru
          _
        %s410 = sand.u32 %s89, 1
        %s411 = scalar_lea.sflag [#allocation4], %s410
        %s412 = sand.u32 %s89, 1
        %s413 = smul.addr %s412, 16
        %s414 = scalar_lea.vmem [#allocation7], %s413
        // Predicated region
        $region49: #{tpu_custom_call.1} parent=27 // pred_check
          %p415 = pneg %p99
        $region50: #{tpu_custom_call.1} parent=27 // pred_check_branch
          %417 = sbr.rel (%p415) target = $region52
        $region51: #{tpu_custom_call.1} parent=27 // pred_region
          %s418 = smul.u32 2, %s24
          %s420 = ssub.s32 256, 256
          %421 = vsyncadd %s411, %s420
          %s422 = smul.addr %s418, 128
          %s423 = scalar_lea.hbm %s2, %s422
          %s424 = sshll.u32 %s414, 4
          %s425 = int_to_ptr.vmem [resolvable:$true] %s424
          %430 = dma.vmem_to_hbm [thread:$0]  %s425, 256, %s423, %s411, 128, 128, 8
        $region52: #{tpu_custom_call.1} parent=27 // pred_fallthru
          _
      $region28: #{tpu_custom_call.1} parent=5 // pred_fallthru
        _
      %p431 = scmp.le.s32.totalorder 2, %s15
      // Predicated region
      $region53: #{tpu_custom_call.1} parent=5 // pred_check
        %p432 = pneg %p431
      $region54: #{tpu_custom_call.1} parent=5 // pred_check_branch
        %434 = sbr.rel (%p432) target = $region56
      $region55: #{tpu_custom_call.1} parent=5 // pred_region
        %s435 = ssub.s32 %s15, 2
        // Predicated region
        $region57: #{tpu_custom_call.1} parent=55 // pred_check
          %p436 = pneg %p105
        $region58: #{tpu_custom_call.1} parent=55 // pred_check_branch
          %438 = sbr.rel (%p436) target = $region60
        $region59: #{tpu_custom_call.1} parent=55 // pred_region
          %s439 = sand.u32 %s90, 1
          %s440 = scalar_lea.sflag [#allocation4], %s439
          %s441 = sand.u32 %s90, 1
          %s442 = smul.addr %s441, 16
          %s443 = scalar_lea.vmem [#allocation7], %s442
          %444 = dma.done %s440, 256
        $region60: #{tpu_custom_call.1} parent=55 // pred_fallthru
          _
      $region56: #{tpu_custom_call.1} parent=5 // pred_fallthru
        _
    $region6: #{tpu_custom_call.1} parent=1 // loop_footer
      %s19 = sadd.s32 1, %s15
    $region7: #{tpu_custom_call.1} parent=1 // loop_footer_branch
      %14 = sbr.rel target = $region3
    $region8: #{tpu_custom_call.1} parent=1 // loop_exit
      _
    %445 = vsyncpa [#allocation3], 1
    %s446 = scalar_lea.sflag [#allocation3], 1
    %447 = vsyncpa %s446, 1
    %448 = vsyncpa [#allocation4], 1
    %s449 = scalar_lea.sflag [#allocation4], 1
    %450 = vsyncpa %s449, 1
    %451 = vsyncpa [#allocation5], 1
    %s452 = scalar_lea.sflag [#allocation5], 1
    %453 = vsyncpa %s452, 1

</llo_original>
